<compile_context>
chip_gen: v7x
topology: tpu7x:2x2x1
jax: 0.10.0
libtpu: 0.0.40
codegen_flags: <defaults>
</compile_context>

<pallas_src>
import jax
import jax.numpy as jnp
from jax.experimental import pallas as pl
from jax.experimental.pallas import tpu as pltpu

STATE_DIM = 4        # CartPole-v1 observation dim
HIDDEN_DIM = 128
ACTION_DIM = 2       # CartPole-v1 action dim (softmax specialized to 2 classes)
K_AUG = 8            # STATE_DIM + 1 (bias ones-row), zero-padded to a sublane multiple
TILE_B_MAX = 16384   # f32 [128, TILE_B] hidden = 8 MiB -> inside scoped VMEM everywhere


def actor_kernel(x_ref, w1_ref, w2d_ref, b2d_ref, o_ref):
    # x_ref  : [K_AUG, TILE_B]      rows 0..3 = features, row 4 = ones, rows 5..7 = 0
    # w1_ref : [HIDDEN_DIM, K_AUG]  cols 0..3 = W1, col 4 = b1, cols 5..7 = 0
    # w2d_ref: [1, HIDDEN_DIM]      W2[1] - W2[0]
    # b2d_ref: [1, 1]               b2[1] - b2[0]
    # o_ref  : [1, TILE_B]          softmax(logits)[:, 1]; p0 = 1 - p1 in the wrapper
    #
    # Linear1 (+ bias via the ones-row) on the MXU; only ReLU stays on the VPU.
    h = jnp.dot(w1_ref[...], x_ref[...], preferred_element_type=jnp.float32)
    h = jnp.maximum(h, 0.0)
    # Linear2 collapsed to the logit difference: one matvec on the MXU.
    d = jnp.dot(w2d_ref[...], h, preferred_element_type=jnp.float32) + b2d_ref[...]
    # 2-class softmax == sigmoid(d); exp and approx reciprocal both use the EUP slot.
    o_ref[...] = pl.reciprocal(1.0 + jnp.exp(-d), approx=True)


def _cdiv(a, b):
    return -(-a // b)


def _round_up(x, m):
    return _cdiv(x, m) * m


def _pick_tiles(batch):
    """Balanced batch tiling: pads by <128 rows (no near-empty tail tile) and
    keeps >=2 grid steps for non-trivial batches so the 'parallel' grid axis
    can be sharded across both v7x TensorCores."""
    n = _cdiv(max(batch, 1), TILE_B_MAX)
    if n == 1 and batch > 128:
        n = 2
    tb = _round_up(_cdiv(max(batch, 1), n), 128)
    return tb, n * tb


@jax.jit
def actor_forward(states, w1, b1, w2, b2):
    """states: [B, STATE_DIM] f32 -> action probabilities [B, ACTION_DIM]."""
    B = states.shape[0]
    tb, b_pad = _pick_tiles(B)

    # Fold the layer-1 bias into an augmented weight (K padded 5 -> 8).
    w1_aug = jnp.zeros((HIDDEN_DIM, K_AUG), jnp.float32)
    w1_aug = w1_aug.at[:, :STATE_DIM].set(w1.astype(jnp.float32))
    w1_aug = w1_aug.at[:, STATE_DIM].set(b1.astype(jnp.float32))

    # Only the logit difference is needed for the 2-class softmax.
    w2d = (w2[1] - w2[0]).astype(jnp.float32).reshape(1, HIDDEN_DIM)
    b2d = (b2[1] - b2[0]).astype(jnp.float32).reshape(1, 1)

    # Lane-dense layout: batch on the 128-wide lane axis; row STATE_DIM is the
    # bias ones-row.  Zero-padded batch columns produce valid (sliced-off) probs.
    # TODO(synk): if the rollout pipeline can supply [K_AUG, B] directly (and
    # consume lane-major probabilities), drop this transpose/pad relayout.
    x_t = states.astype(jnp.float32).T                                   # [4, B]
    x_aug = jnp.concatenate(
        [x_t,
         jnp.ones((1, B), jnp.float32),
         jnp.zeros((K_AUG - STATE_DIM - 1, B), jnp.float32)],
        axis=0)                                                          # [8, B]
    x_aug = jnp.pad(x_aug, ((0, 0), (0, b_pad - B)))

    p1_t = pl.pallas_call(
        actor_kernel,
        out_shape=jax.ShapeDtypeStruct((1, b_pad), jnp.float32),
        grid=(b_pad // tb,),
        in_specs=[
            pl.BlockSpec((K_AUG, tb), lambda i: (0, i)),
            pl.BlockSpec((HIDDEN_DIM, K_AUG), lambda i: (0, 0)),
            pl.BlockSpec((1, HIDDEN_DIM), lambda i: (0, 0)),
            pl.BlockSpec((1, 1), lambda i: (0, 0)),
        ],
        out_specs=pl.BlockSpec((1, tb), lambda i: (0, i)),
        compiler_params=pltpu.CompilerParams(
            # Independent batch tiles: shard across both TensorCores on v7x.
            dimension_semantics=("parallel",),
        ),
    )(x_aug, w1_aug, w2d, b2d)

    p1 = p1_t[0, :B]
    return jnp.stack([1.0 - p1, p1], axis=-1)      # [B, ACTION_DIM]


def init_params(key):
    # Mirrors the PyTorch init: weight ~ N(0, 0.1), bias = 0 (torch [out, in] layout).
    k1, k2 = jax.random.split(key)
    w1 = 0.1 * jax.random.normal(k1, (HIDDEN_DIM, STATE_DIM), jnp.float32)
    b1 = jnp.zeros((HIDDEN_DIM,), jnp.float32)
    w2 = 0.1 * jax.random.normal(k2, (ACTION_DIM, HIDDEN_DIM), jnp.float32)
    b2 = jnp.zeros((ACTION_DIM,), jnp.float32)
    return w1, b1, w2, b2


def _reference(states, w1, b1, w2, b2):
    hidden = jnp.maximum(states @ w1.T + b1, 0.0)
    return jax.nn.softmax(hidden @ w2.T + b2, axis=1)


if __name__ == "__main__":
    key = jax.random.PRNGKey(0)
    pkey, xkey1, xkey2 = jax.random.split(key, 3)
    w1, b1, w2, b2 = init_params(pkey)

    # Small batch of CartPole states (single-tile path).
    B = 8
    states = jax.random.normal(xkey1, (B, STATE_DIM), jnp.float32)
    out = jax.block_until_ready(actor_forward(states, w1, b1, w2, b2))
    ref = _reference(states, w1, b1, w2, b2)

    assert out.shape == (B, ACTION_DIM)
    # approx reciprocal (EUP) has ~2^-12 relative error; probabilities are <= 1.
    assert jnp.allclose(out, ref, atol=2e-3)
    assert jnp.allclose(jnp.sum(out, axis=1), 1.0, atol=1e-6)

    # Exercise the multi-tile / padded-batch path (2 grid steps, padded cols).
    B2 = 300
    states2 = jax.random.normal(xkey2, (B2, STATE_DIM), jnp.float32)
    out2 = jax.block_until_ready(actor_forward(states2, w1, b1, w2, b2))
    ref2 = _reference(states2, w1, b1, w2, b2)

    assert out2.shape == (B2, ACTION_DIM)
    assert jnp.allclose(out2, ref2, atol=2e-3)
    assert jnp.allclose(jnp.sum(out2, axis=1), 1.0, atol=1e-6)

    print("KERNEL_OK")
</pallas_src>

<mosaic_0001>
module attributes {stable_mosaic.version = 11 : i64} {
  func.func @actor_kernel(%arg0: i32, %arg1: memref<8x128xf32, #tpu.memory_space<vmem>>, %arg2: memref<128x8xf32, #tpu.memory_space<vmem>>, %arg3: memref<1x128xf32, #tpu.memory_space<vmem>>, %arg4: memref<1x1xf32, #tpu.memory_space<vmem>>, %arg5: memref<1x128xf32, #tpu.memory_space<vmem>>) attributes {dimension_semantics = [#tpu.dimension_semantics<parallel>], iteration_bounds = array<i64: 1>, scalar_prefetch = 0 : i64, scratch_operands = 0 : i64, tpu.core_type = #tpu.core_type<tc>, window_params = [{transform_indices = @transform_0, window_bounds = array<i64: 8, 128>}, {pipeline_mode = #tpu.pipeline_mode<synchronous>, transform_indices = @transform_1, window_bounds = array<i64: 128, 8>}, {pipeline_mode = #tpu.pipeline_mode<synchronous>, transform_indices = @transform_2, window_bounds = array<i64: 1, 128>}, {pipeline_mode = #tpu.pipeline_mode<synchronous>, transform_indices = @transform_3, window_bounds = array<i64: 1, 1>}, {transform_indices = @transform_4, window_bounds = array<i64: 1, 128>}]} {
    %c0 = arith.constant 0 : index
    %c0_0 = arith.constant 0 : index
    %0 = vector.load %arg2[%c0, %c0_0] : memref<128x8xf32, #tpu.memory_space<vmem>>, vector<128x8xf32>
    %c0_1 = arith.constant 0 : index
    %c0_2 = arith.constant 0 : index
    %1 = vector.load %arg1[%c0_1, %c0_2] : memref<8x128xf32, #tpu.memory_space<vmem>>, vector<8x128xf32>
    %cst = arith.constant dense<0.000000e+00> : vector<128x128xf32>
    %2 = tpu.matmul %0, %1, %cst {dimension_numbers = #tpu.dot_dimension_numbers<[1], [0], [0], [1], [0, 0, 1, 1], [], []>} : vector<128x8xf32>, vector<8x128xf32>, vector<128x128xf32> -> vector<128x128xf32>
    %cst_3 = arith.constant 0.000000e+00 : f32
    %3 = vector.broadcast %cst_3 : f32 to vector<128x128xf32>
    %4 = arith.maximumf %2, %3 : vector<128x128xf32>
    %c0_4 = arith.constant 0 : index
    %c0_5 = arith.constant 0 : index
    %5 = vector.load %arg3[%c0_4, %c0_5] : memref<1x128xf32, #tpu.memory_space<vmem>>, vector<1x128xf32>
    %cst_6 = arith.constant dense<0.000000e+00> : vector<1x128xf32>
    %6 = tpu.matmul %5, %4, %cst_6 {dimension_numbers = #tpu.dot_dimension_numbers<[1], [0], [0], [1], [0, 0, 1, 1], [], []>} : vector<1x128xf32>, vector<128x128xf32>, vector<1x128xf32> -> vector<1x128xf32>
    %c0_7 = arith.constant 0 : index
    %c0_8 = arith.constant 0 : index
    %7 = vector.load %arg4[%c0_7, %c0_8] : memref<1x1xf32, #tpu.memory_space<vmem>>, vector<1x1xf32>
    %8 = vector.broadcast %7 : vector<1x1xf32> to vector<1x128xf32>
    %9 = arith.addf %6, %8 : vector<1x128xf32>
    %cst_9 = arith.constant 0.000000e+00 : f32
    %10 = vector.broadcast %cst_9 : f32 to vector<1x128xf32>
    %11 = arith.subf %10, %9 : vector<1x128xf32>
    %12 = math.exp %11 : vector<1x128xf32>
    %cst_10 = arith.constant 1.000000e+00 : f32
    %13 = vector.broadcast %cst_10 : f32 to vector<1x128xf32>
    %14 = arith.addf %13, %12 : vector<1x128xf32>
    %15 = tpu.reciprocal %14 {approx = true} : vector<1x128xf32> -> vector<1x128xf32>
    %c0_11 = arith.constant 0 : index
    %c0_12 = arith.constant 0 : index
    %16 = vector.load %arg5[%c0_11, %c0_12] : memref<1x128xf32, #tpu.memory_space<vmem>>, vector<1x128xf32>
    tpu.vector_store %arg5[%c0_11, %c0_12], %15 {strides = array<i32>} : memref<1x128xf32, #tpu.memory_space<vmem>>, vector<1x128xf32>,
    return
  }
  func.func @transform_0(%arg0: i32) -> (i32, i32) {
    %c0_i32 = arith.constant 0 : i32
    %c0_i32_0 = arith.constant 0 : i32
    return %c0_i32, %arg0 : i32, i32
  }
  func.func @transform_1(%arg0: i32) -> (i32, i32) {
    %c0_i32 = arith.constant 0 : i32
    %c0_i32_0 = arith.constant 0 : i32
    %c0_i32_1 = arith.constant 0 : i32
    return %c0_i32, %c0_i32_0 : i32, i32
  }
  func.func @transform_2(%arg0: i32) -> (i32, i32) {
    %c0_i32 = arith.constant 0 : i32
    %c0_i32_0 = arith.constant 0 : i32
    %c0_i32_1 = arith.constant 0 : i32
    return %c0_i32, %c0_i32_0 : i32, i32
  }
  func.func @transform_3(%arg0: i32) -> (i32, i32) {
    %c0_i32 = arith.constant 0 : i32
    %c0_i32_0 = arith.constant 0 : i32
    %c0_i32_1 = arith.constant 0 : i32
    return %c0_i32, %c0_i32_0 : i32, i32
  }
  func.func @transform_4(%arg0: i32) -> (i32, i32) {
    %c0_i32 = arith.constant 0 : i32
    %c0_i32_0 = arith.constant 0 : i32
    return %c0_i32, %arg0 : i32, i32
  }
}

</mosaic_0001>

<llo_original>
// kernel: actor_forward.1
$region0: #{actor_forward.1}
  #allocation0 [shape = 'u32[]', space=smem, size = 0x4, offset = 0x4, fixed_abs, tag = 'smem constant byte address 0x4 - core index']
  #allocation1 [shape = 'u32[144,128]{1,0:T(1,128)}', space=vmem, size = 0x12000, scoped, tag = 'internal scratch']
  #allocation2 [shape = 'f32[1,1]{1,0:T(1,128)S(1)}', space=vmem, size = 0x200, scoped, tag = 'scoped memory for actor_forward.1']
  %s0 = inlined_call_operand.vmem [shape: f32[8,128], index: 0, kind: input, shape index: {}]
  %s1 = inlined_call_operand.vmem [shape: f32[128,8], index: 1, kind: input, shape index: {}]
  %s2 = inlined_call_operand.vmem [shape: f32[1,128], index: 2, kind: input, shape index: {}]
  %s3 = inlined_call_operand.<no memory space> [shape: f32[1,1], index: 3, kind: input, shape index: {}]
  %s4 = inlined_call_operand.vmem [shape: f32[1,128], index: 4, kind: output, shape index: {}]
  %s5 = sld [smem:[#allocation0]]
  $region26: #{actor_forward.1} parent=0
    _
  %s7 = ssub.s32 1, %s5
  %s8 = scalar_select 0, %s7, %s5
  %v9 = vstv %s3
  %10 = vst [vmem:[#allocation2] sm:$0x1] %v9
  // Predicated region
  $region2: #{actor_forward.1} parent=0 // pred_check
    _
  $region3: #{actor_forward.1} parent=0 // pred_check_branch
    %12 = sbr.rel (0) target = $region5
  $region4: #{actor_forward.1} parent=0 // pred_region
    _
  $region5: #{actor_forward.1} parent=0 // pred_fallthru
    _
  // Predicated region
  $region6: #{actor_forward.1} parent=0 // pred_check
    _
  $region7: #{actor_forward.1} parent=0 // pred_check_branch
    %14 = sbr.rel (0) target = $region9
  $region8: #{actor_forward.1} parent=0 // pred_region
    _
  $region9: #{actor_forward.1} parent=0 // pred_fallthru
    _
  // Predicated region
  $region10: #{actor_forward.1} parent=0 // pred_check
    _
  $region11: #{actor_forward.1} parent=0 // pred_check_branch
    %16 = sbr.rel (0) target = $region13
  $region12: #{actor_forward.1} parent=0 // pred_region
    _
  $region13: #{actor_forward.1} parent=0 // pred_fallthru
    _
  // Predicated region
  $region14: #{actor_forward.1} parent=0 // pred_check
    _
  $region15: #{actor_forward.1} parent=0 // pred_check_branch
    %18 = sbr.rel (0) target = $region17
  $region16: #{actor_forward.1} parent=0 // pred_region
    _
  $region17: #{actor_forward.1} parent=0 // pred_fallthru
    _
  %v19 = vld [vmem:[%s1] sm:$0xff]
  %v20 = vld [vmem:[%s1 + $0x8] sm:$0xff]
  %v21 = vld [vmem:[%s1 + $0x10] sm:$0xff]
  %v22 = vld [vmem:[%s1 + $0x18] sm:$0xff]
  %v23 = vld [vmem:[%s1 + $0x20] sm:$0xff]
  %v24 = vld [vmem:[%s1 + $0x28] sm:$0xff]
  %v25 = vld [vmem:[%s1 + $0x30] sm:$0xff]
  %v26 = vld [vmem:[%s1 + $0x38] sm:$0xff]
  %v27 = vld [vmem:[%s1 + $0x40] sm:$0xff]
  %v28 = vld [vmem:[%s1 + $0x48] sm:$0xff]
  %v29 = vld [vmem:[%s1 + $0x50] sm:$0xff]
  %v30 = vld [vmem:[%s1 + $0x58] sm:$0xff]
  %v31 = vld [vmem:[%s1 + $0x60] sm:$0xff]
  %v32 = vld [vmem:[%s1 + $0x68] sm:$0xff]
  %v33 = vld [vmem:[%s1 + $0x70] sm:$0xff]
  %v34 = vld [vmem:[%s1 + $0x78] sm:$0xff]
  %v35 = vld [vmem:[%s0] sm:$0xff]
  %vm36 = vcmask 64512
  %v38 = vsel %vm36, %v19, 0
  %v41 = vsel %vm36, %v20, 0
  %v44 = vsel %vm36, %v21, 0
  %v47 = vsel %vm36, %v22, 0
  %v50 = vsel %vm36, %v23, 0
  %v53 = vsel %vm36, %v24, 0
  %v56 = vsel %vm36, %v25, 0
  %v59 = vsel %vm36, %v26, 0
  %v62 = vsel %vm36, %v27, 0
  %v65 = vsel %vm36, %v28, 0
  %v68 = vsel %vm36, %v29, 0
  %v71 = vsel %vm36, %v30, 0
  %v74 = vsel %vm36, %v31, 0
  %v77 = vsel %vm36, %v32, 0
  %v80 = vsel %vm36, %v33, 0
  %v83 = vsel %vm36, %v34, 0
  %85 = vmatprep.subr.mxu0 0.0
  %86 = vmatpush1.msra.mxu0 %v35
  %87 = vmatprep.subr.mxu0 0.0
  %88 = vmatpush1.msra.mxu0 0.0
  %89 = vmatprep.subr.mxu0 0.0
  %90 = vmatpush1.msra.mxu0 0.0
  %91 = vmatprep.subr.mxu0 0.0
  %92 = vmatpush1.msra.mxu0 0.0
  %93 = vmatprep.subr.mxu0 0.0
  %94 = vmatpush1.msra.mxu0 0.0
  %95 = vmatprep.subr.mxu0 0.0
  %96 = vmatpush1.msra.mxu0 0.0
  %97 = vmatprep.subr.mxu0 0.0
  %98 = vmatpush1.msra.mxu0 0.0
  %99 = vmatprep.subr.mxu0 0.0
  %100 = vmatpush1.msra.mxu0 0.0
  %101 = vmatprep.subr.mxu0 0.0
  %102 = vmatpush1.msra.mxu0 0.0
  %103 = vmatprep.subr.mxu0 0.0
  %104 = vmatpush1.msra.mxu0 0.0
  %105 = vmatprep.subr.mxu0 0.0
  %106 = vmatpush1.msra.mxu0 0.0
  %107 = vmatprep.subr.mxu0 0.0
  %108 = vmatpush1.msra.mxu0 0.0
  %109 = vmatprep.subr.mxu0 0.0
  %110 = vmatpush1.msra.mxu0 0.0
  %111 = vmatprep.subr.mxu0 0.0
  %112 = vmatpush1.msra.mxu0 0.0
  %113 = vmatprep.subr.mxu0 0.0
  %114 = vmatpush1.msra.mxu0 0.0
  %115 = vmatprep.subr.mxu0 0.0
  %116 = vmatpush1.msra.mxu0 0.0
  %117 = vmatprep.subr.mxu0 0.0
  %118 = vmatpush1.msra.mxu0 0.0
  %119 = vmatprep.subr.mxu0 0.0
  %120 = vmatpush1.msra.mxu0 0.0
  %121 = vmatprep.subr.mxu0 0.0
  %122 = vmatpush1.msra.mxu0 0.0
  %123 = vmatprep.subr.mxu0 0.0
  %124 = vmatpush1.msra.mxu0 0.0
  %125 = vmatprep.subr.mxu0 0.0
  %126 = vmatpush1.msra.mxu0 0.0
  %127 = vmatprep.subr.mxu0 0.0
  %128 = vmatpush1.msra.mxu0 0.0
  %129 = vmatprep.subr.mxu0 0.0
  %130 = vmatpush1.msra.mxu0 0.0
  %131 = vmatprep.subr.mxu0 0.0
  %132 = vmatpush1.msra.mxu0 0.0
  %133 = vmatprep.subr.mxu0 0.0
  %134 = vmatpush1.msra.mxu0 0.0
  %135 = vmatprep.subr.mxu0 0.0
  %136 = vmatpush1.msra.mxu0 0.0
  %137 = vmatprep.subr.mxu0 0.0
  %138 = vmatpush1.msra.mxu0 0.0
  %139 = vmatprep.subr.mxu0 0.0
  %140 = vmatpush1.msra.mxu0 0.0
  %141 = vmatprep.subr.mxu0 0.0
  %142 = vmatpush1.msra.mxu0 0.0
  %143 = vmatprep.subr.mxu0 0.0
  %144 = vmatpush1.msra.mxu0 0.0
  %145 = vmatprep.subr.mxu0 0.0
  %146 = vmatpush1.msra.mxu0 0.0
  %147 = vmatprep.subr.mxu0 0.0
  %148 = vmatpush1.msra.mxu0 0.0
  %149 = vmatprep.mubr.f32.mxu0 0.0
  %150 = vmatmul.mubr.f32.gmra.mrb[0].mxu0 %v38
  %v151 = vpop.f32.mrb[0].mxu0
  %v152 = vadd.f32 0.0, %v151
  %v153 = vpop.f32.mrb[0].mxu0
  %154 = vmatprep.mubr.f32.mxu0 0.0
  %155 = vmatmul.mubr.f32.gmra.mrb[0].mxu0 %v41
  %v156 = vpop.f32.mrb[0].mxu0
  %v157 = vadd.f32 0.0, %v156
  %v158 = vpop.f32.mrb[0].mxu0
  %159 = vmatprep.mubr.f32.mxu0 0.0
  %160 = vmatmul.mubr.f32.gmra.mrb[0].mxu0 %v44
  %v161 = vpop.f32.mrb[0].mxu0
  %v162 = vadd.f32 0.0, %v161
  %v163 = vpop.f32.mrb[0].mxu0
  %164 = vmatprep.mubr.f32.mxu0 0.0
  %165 = vmatmul.mubr.f32.gmra.mrb[0].mxu0 %v47
  %v166 = vpop.f32.mrb[0].mxu0
  %v167 = vadd.f32 0.0, %v166
  %v168 = vpop.f32.mrb[0].mxu0
  %169 = vmatprep.mubr.f32.mxu0 0.0
  %170 = vmatmul.mubr.f32.gmra.mrb[0].mxu0 %v50
  %v171 = vpop.f32.mrb[0].mxu0
  %v172 = vadd.f32 0.0, %v171
  %v173 = vpop.f32.mrb[0].mxu0
  %174 = vmatprep.mubr.f32.mxu0 0.0
  %175 = vmatmul.mubr.f32.gmra.mrb[0].mxu0 %v53
  %v176 = vpop.f32.mrb[0].mxu0
  %v177 = vadd.f32 0.0, %v176
  %v178 = vpop.f32.mrb[0].mxu0
  %179 = vmatprep.mubr.f32.mxu0 0.0
  %180 = vmatmul.mubr.f32.gmra.mrb[0].mxu0 %v56
  %v181 = vpop.f32.mrb[0].mxu0
  %v182 = vadd.f32 0.0, %v181
  %v183 = vpop.f32.mrb[0].mxu0
  %184 = vmatprep.mubr.f32.mxu0 0.0
  %185 = vmatmul.mubr.f32.gmra.mrb[0].mxu0 %v59
  %v186 = vpop.f32.mrb[0].mxu0
  %v187 = vadd.f32 0.0, %v186
  %v188 = vpop.f32.mrb[0].mxu0
  %189 = vmatprep.mubr.f32.mxu0 0.0
  %190 = vmatmul.mubr.f32.gmra.mrb[0].mxu0 %v62
  %v191 = vpop.f32.mrb[0].mxu0
  %v192 = vadd.f32 0.0, %v191
  %v193 = vpop.f32.mrb[0].mxu0
  %194 = vmatprep.mubr.f32.mxu0 0.0
  %195 = vmatmul.mubr.f32.gmra.mrb[0].mxu0 %v65
  %v196 = vpop.f32.mrb[0].mxu0
  %v197 = vadd.f32 0.0, %v196
  %v198 = vpop.f32.mrb[0].mxu0
  %199 = vmatprep.mubr.f32.mxu0 0.0
  %200 = vmatmul.mubr.f32.gmra.mrb[0].mxu0 %v68
  %v201 = vpop.f32.mrb[0].mxu0
  %v202 = vadd.f32 0.0, %v201
  %v203 = vpop.f32.mrb[0].mxu0
  %204 = vmatprep.mubr.f32.mxu0 0.0
  %205 = vmatmul.mubr.f32.gmra.mrb[0].mxu0 %v71
  %v206 = vpop.f32.mrb[0].mxu0
  %v207 = vadd.f32 0.0, %v206
  %v208 = vpop.f32.mrb[0].mxu0
  %209 = vmatprep.mubr.f32.mxu0 0.0
  %210 = vmatmul.mubr.f32.gmra.mrb[0].mxu0 %v74
  %v211 = vpop.f32.mrb[0].mxu0
  %v212 = vadd.f32 0.0, %v211
  %v213 = vpop.f32.mrb[0].mxu0
  %214 = vmatprep.mubr.f32.mxu0 0.0
  %215 = vmatmul.mubr.f32.gmra.mrb[0].mxu0 %v77
  %v216 = vpop.f32.mrb[0].mxu0
  %v217 = vadd.f32 0.0, %v216
  %v218 = vpop.f32.mrb[0].mxu0
  %219 = vmatprep.mubr.f32.mxu0 0.0
  %220 = vmatmul.mubr.f32.gmra.mrb[0].mxu0 %v80
  %v221 = vpop.f32.mrb[0].mxu0
  %v222 = vadd.f32 0.0, %v221
  %v223 = vpop.f32.mrb[0].mxu0
  %224 = vmatprep.mubr.f32.mxu0 0.0
  %225 = vmatmul.mubr.f32.gmra.mrb[0].mxu0 %v83
  %v226 = vpop.f32.mrb[0].mxu0
  %v227 = vadd.f32 0.0, %v226
  %v228 = vpop.f32.mrb[0].mxu0
  %229 = vdwg.mxu0
  %v230 = vmax.f32 %v152, 0.0
  %v231 = vmax.f32 %v157, 0.0
  %v232 = vmax.f32 %v162, 0.0
  %v233 = vmax.f32 %v167, 0.0
  %v234 = vmax.f32 %v172, 0.0
  %v235 = vmax.f32 %v177, 0.0
  %v236 = vmax.f32 %v182, 0.0
  %v237 = vmax.f32 %v187, 0.0
  %v238 = vmax.f32 %v192, 0.0
  %v239 = vmax.f32 %v197, 0.0
  %v240 = vmax.f32 %v202, 0.0
  %v241 = vmax.f32 %v207, 0.0
  %v242 = vmax.f32 %v212, 0.0
  %v243 = vmax.f32 %v217, 0.0
  %v244 = vmax.f32 %v222, 0.0
  %v245 = vmax.f32 %v227, 0.0
  %v246 = vld [vmem:[%s2] sm:$0x1]
  %v247 = vld [vmem:[#allocation2] sm:$0x1]
  %249 = vset.pattern.permute.xlu0 0
  %250 = vperm.xlu0 %249, %v247
  %v251 = vpop.permute.xlu0 %250
  %v253 = vlaneseq
  %v254 = vshrl.u32 %v253, 7
  %v255 = vsub.s32 0, %v254
  %v256 = vrot.slane %v251, %v255
  %257 = vmatprep.subr.mxu0 0.0
  %258 = vmatpush1.msra.mxu0 %v230
  %259 = vmatprep.subr.mxu0 0.0
  %260 = vmatpush1.msra.mxu0 %v231
  %261 = vmatprep.subr.mxu0 0.0
  %262 = vmatpush1.msra.mxu0 %v232
  %263 = vmatprep.subr.mxu0 0.0
  %264 = vmatpush1.msra.mxu0 %v233
  %265 = vmatprep.subr.mxu0 0.0
  %266 = vmatpush1.msra.mxu0 %v234
  %267 = vmatprep.subr.mxu0 0.0
  %268 = vmatpush1.msra.mxu0 %v235
  %269 = vmatprep.subr.mxu0 0.0
  %270 = vmatpush1.msra.mxu0 %v236
  %271 = vmatprep.subr.mxu0 0.0
  %272 = vmatpush1.msra.mxu0 %v237
  %273 = vmatprep.subr.mxu0 0.0
  %274 = vmatpush1.msra.mxu0 %v238
  %275 = vmatprep.subr.mxu0 0.0
  %276 = vmatpush1.msra.mxu0 %v239
  %277 = vmatprep.subr.mxu0 0.0
  %278 = vmatpush1.msra.mxu0 %v240
  %279 = vmatprep.subr.mxu0 0.0
  %280 = vmatpush1.msra.mxu0 %v241
  %281 = vmatprep.subr.mxu0 0.0
  %282 = vmatpush1.msra.mxu0 %v242
  %283 = vmatprep.subr.mxu0 0.0
  %284 = vmatpush1.msra.mxu0 %v243
  %285 = vmatprep.subr.mxu0 0.0
  %286 = vmatpush1.msra.mxu0 %v244
  %287 = vmatprep.subr.mxu0 0.0
  %288 = vmatpush1.msra.mxu0 %v245
  %289 = vmatprep.subr.mxu0 0.0
  %290 = vmatpush1.msra.mxu0 0.0
  %291 = vmatprep.subr.mxu0 0.0
  %292 = vmatpush1.msra.mxu0 0.0
  %293 = vmatprep.subr.mxu0 0.0
  %294 = vmatpush1.msra.mxu0 0.0
  %295 = vmatprep.subr.mxu0 0.0
  %296 = vmatpush1.msra.mxu0 0.0
  %297 = vmatprep.subr.mxu0 0.0
  %298 = vmatpush1.msra.mxu0 0.0
  %299 = vmatprep.subr.mxu0 0.0
  %300 = vmatpush1.msra.mxu0 0.0
  %301 = vmatprep.subr.mxu0 0.0
  %302 = vmatpush1.msra.mxu0 0.0
  %303 = vmatprep.subr.mxu0 0.0
  %304 = vmatpush1.msra.mxu0 0.0
  %305 = vmatprep.subr.mxu0 0.0
  %306 = vmatpush1.msra.mxu0 0.0
  %307 = vmatprep.subr.mxu0 0.0
  %308 = vmatpush1.msra.mxu0 0.0
  %309 = vmatprep.subr.mxu0 0.0
  %310 = vmatpush1.msra.mxu0 0.0
  %311 = vmatprep.subr.mxu0 0.0
  %312 = vmatpush1.msra.mxu0 0.0
  %313 = vmatprep.subr.mxu0 0.0
  %314 = vmatpush1.msra.mxu0 0.0
  %315 = vmatprep.subr.mxu0 0.0
  %316 = vmatpush1.msra.mxu0 0.0
  %317 = vmatprep.subr.mxu0 0.0
  %318 = vmatpush1.msra.mxu0 0.0
  %319 = vmatprep.subr.mxu0 0.0
  %320 = vmatpush1.msra.mxu0 0.0
  %321 = vmatprep.mubr.f32.mxu0 0.0
  %322 = vmatmul.mubr.f32.gmra.mrb[0].mxu0 %v246
  %v323 = vpop.f32.mrb[0].mxu0
  %v324 = vadd.f32 %v256, %v323
  %v325 = vpop.f32.mrb[0].mxu0
  %326 = vdwg.mxu0
  %v327 = vsub.f32 0.0, %v324
  %v328 = vmul.f32 %v327, 1.442695
  %v329 = vpow.pop %v328
  %v330 = vadd.f32 %v329, 1.0
  %v331 = vrcp.pop %v330
  %332 = vst [vmem:[%s4] sm:$0x1] %v331
  // Predicated region
  $region18: #{actor_forward.1} parent=0 // pred_check
    _
  $region19: #{actor_forward.1} parent=0 // pred_check_branch
    %334 = sbr.rel (0) target = $region21
  $region20: #{actor_forward.1} parent=0 // pred_region
    _
  $region21: #{actor_forward.1} parent=0 // pred_fallthru
    _
  // Predicated region
  $region22: #{actor_forward.1} parent=0 // pred_check
    _
  $region23: #{actor_forward.1} parent=0 // pred_check_branch
    %336 = sbr.rel (0) target = $region25
  $region24: #{actor_forward.1} parent=0 // pred_region
    _
  $region25: #{actor_forward.1} parent=0 // pred_fallthru
    _

</llo_original>
